<compile_context>
chip_gen: v6e
topology: v6e:2x2x1
jax: 0.10.0
libtpu: 0.0.40
codegen_flags: <defaults>
</compile_context>

<pallas_src>
import jax
import jax.numpy as jnp
from jax.experimental import pallas as pl
from jax.experimental.pallas import tpu as pltpu

_LANE = 128
_SUBLANE = 8


def _round_up(x, m):
    return ((x + m - 1) // m) * m


def _vmem_budget_bytes():
    """~75% of per-core VMEM: ~48 MiB on v7x (64 MiB parts), ~96 MiB on v5e/v6e
    (128 MiB parts). Leaves headroom for compiler-internal scratch / metadata."""
    try:
        cap = int(pltpu.get_tpu_info().vmem_capacity_bytes)
    except Exception:
        cap = 64 * 1024 * 1024  # conservative fallback (v7x per-TC)
    return (3 * cap) // 4


# ---------------------------------------------------------------------------
# Kernels
# ---------------------------------------------------------------------------
def _fc_softmax_kernel(x_ref, w_ref, b_ref, o_ref):
    """Single pass: full feature dim resident per tile."""
    # MXU matmul in the input dtype, f32 accumulation.
    logits = jnp.dot(x_ref[...], w_ref[...], preferred_element_type=jnp.float32)
    logits = logits + b_ref[...]  # (1, C_pad) f32, broadcasts over rows
    # Numerically stable softmax over the lane-dense (padded) class axis.
    # Padded columns carry a huge negative bias -> exp underflows to exactly 0.
    m = jnp.max(logits, axis=-1, keepdims=True)
    e = jnp.exp(logits - m)
    denom = jnp.sum(e, axis=-1, keepdims=True)
    # Exact reciprocal: denom is (block_b, 1) so normalization is effectively
    # free next to block_b*C_pad exps; exact keeps row sums == 1.
    o_ref[...] = (e / denom).astype(o_ref.dtype)


def _fc_softmax_ksplit_kernel(x_ref, w_ref, b_ref, o_ref, acc_ref):
    """Feature-tiled path: accumulate partial matmuls over the K grid axis."""
    k = pl.program_id(1)

    @pl.when(k == 0)
    def _():
        acc_ref[...] = jnp.zeros_like(acc_ref)

    acc_ref[...] += jnp.dot(x_ref[...], w_ref[...],
                            preferred_element_type=jnp.float32)

    @pl.when(k == pl.num_programs(1) - 1)
    def _():
        logits = acc_ref[...] + b_ref[...]
        m = jnp.max(logits, axis=-1, keepdims=True)
        e = jnp.exp(logits - m)
        denom = jnp.sum(e, axis=-1, keepdims=True)
        o_ref[...] = (e / denom).astype(o_ref.dtype)


# ---------------------------------------------------------------------------
# Wrapper
# ---------------------------------------------------------------------------
def fc_classifier_forward(x, w, b, *, block_b=None, block_f=None,
                          out_dtype=None, return_padded=False):
    """Equivalent of nn.Sequential(nn.Linear(F, C), nn.Softmax(dim=1))(x).

    x: (B, F), w: (F, C), b: (C,) or (1, C).
    Returns (B, C) in out_dtype (default: x.dtype), or the padded (B, C_pad)
    buffer if return_padded=True (lets the consumer fuse the class slice
    instead of a separate XLA pass over the output).
    """
    B, F = x.shape
    Fw, C = w.shape
    assert F == Fw, (F, Fw)
    if out_dtype is None:
        out_dtype = x.dtype  # bf16 in -> bf16 out halves output writeback bytes
    out_dtype = jnp.dtype(out_dtype)
    b = jnp.asarray(b).reshape(1, C).astype(jnp.float32)

    # ---- Lane-dense class dimension (e.g. C=10 -> 128). -------------------
    # Keep C_pad at ONE lane group: at small F the binding units are EUP exp
    # and output HBM writeback, not the MXU, so padding further only adds work.
    C_pad = _round_up(max(C, _LANE), _LANE)
    if C_pad != C:
        # Zero weight columns + very negative f32 bias -> padded logits
        # underflow to 0 under exp, so softmax over real classes is exact.
        # (Bias is kept in f32; finfo(f32).min would overflow if downcast.)
        w_p = jnp.pad(w, ((0, 0), (0, C_pad - C)))
        b_p = jnp.pad(b, ((0, 0), (0, C_pad - C)),
                      constant_values=float(jnp.finfo(jnp.float32).min))
    else:
        w_p, b_p = w, b

    x_item = jnp.dtype(x.dtype).itemsize
    w_item = jnp.dtype(w_p.dtype).itemsize
    o_item = out_dtype.itemsize
    budget = _vmem_budget_bytes()

    # ---- Padded-layout VMEM estimates (lane dim -> x128, sublane dim -> x8) --
    F_lane = _round_up(F, _LANE)
    resident = _round_up(F, _SUBLANE) * C_pad * w_item + _SUBLANE * C_pad * 4  # w + b
    per_row = 2 * F_lane * x_item + 2 * C_pad * o_item  # double-buffered x / out rows
    rows_budget = (budget - resident) // per_row if budget > resident else 0
    rows_budget = max(0, (rows_budget // _SUBLANE) * _SUBLANE)

    # K-split when the VMEM-resident weights + a reasonable batch tile no
    # longer fit the budget (hits v7x's 64 MiB first), or when forced.
    use_k_split = (block_f is not None) or rows_budget < min(_round_up(B, _SUBLANE), 128)

    if not use_k_split:
        # ------------------------- single-pass path ------------------------
        if block_b is None:
            if B <= rows_budget and B <= 1024:
                block_b = B  # one tile; block == full dim is always layout-legal
            else:
                # >= 2 grid steps so both v7x TensorCores get work; cap at the
                # VMEM budget and ~2K rows (diminishing returns beyond).
                half = _round_up(pl.cdiv(B, 2), _SUBLANE)
                block_b = max(_SUBLANE, min(rows_budget, half, 2048))
        grid_b = pl.cdiv(B, block_b)
        # NOTE: when B % block_b != 0 the final partial tile runs exp over
        # undefined VMEM rows, but output stores are masked -> result correct.

        bb = _round_up(block_b, _SUBLANE)
        est = 2 * bb * F_lane * x_item + resident + 2 * bb * C_pad * o_item
        vmem_limit = int(min(max(2 * est, 16 * 1024 * 1024), budget))

        cost = pl.CostEstimate(  # actual padded work (advisory hint only)
            flops=2 * B * F * C_pad + 5 * B * C_pad,
            transcendentals=B * C_pad,
            bytes_accessed=(x.size * x_item + w_p.size * w_item
                            + b_p.size * 4 + B * C_pad * o_item),
        )

        out_padded = pl.pallas_call(
            _fc_softmax_kernel,
            out_shape=jax.ShapeDtypeStruct((B, C_pad), out_dtype),
            grid_spec=pl.GridSpec(
                grid=(grid_b,),
                in_specs=[
                    pl.BlockSpec((block_b, F), lambda i: (i, 0)),   # x: batch-tiled
                    pl.BlockSpec((F, C_pad), lambda i: (0, 0)),     # w: VMEM-resident
                    pl.BlockSpec((1, C_pad), lambda i: (0, 0)),     # b: VMEM-resident
                ],
                out_specs=pl.BlockSpec((block_b, C_pad), lambda i: (i, 0)),
            ),
            compiler_params=pltpu.CompilerParams(
                dimension_semantics=("parallel",),
                vmem_limit_bytes=vmem_limit,
            ),
            cost_estimate=cost,
        )(x, w_p, b_p)

    else:
        # -------------------- K-(feature)-split path -----------------------
        if block_f is None:
            block_f = 512
        block_f = _round_up(min(block_f, F_lane), _LANE)
        F_pad = _round_up(F, block_f)
        if F_pad != F:
            # zero x columns x zero w rows contribute nothing to the logits
            x = jnp.pad(x, ((0, 0), (0, F_pad - F)))
            w_p = jnp.pad(w_p, ((0, F_pad - F), (0, 0)))
        grid_k = F_pad // block_f

        if block_b is None:
            per_row_k = (2 * block_f * x_item   # x tile (double-buffered)
                         + C_pad * 4            # f32 accumulator
                         + 2 * C_pad * o_item)  # out tile (double-buffered)
            fixed = 2 * block_f * C_pad * w_item + _SUBLANE * C_pad * 4
            rows = (budget - fixed) // per_row_k if budget > fixed else _SUBLANE
            rows = max(_SUBLANE, (rows // _SUBLANE) * _SUBLANE)
            if B <= rows and B <= 1024:
                block_b = B
            else:
                half = _round_up(pl.cdiv(B, 2), _SUBLANE)
                block_b = max(_SUBLANE, min(rows, half, 2048))
        grid_b = pl.cdiv(B, block_b)

        bb = _round_up(block_b, _SUBLANE)
        est = (2 * bb * block_f * x_item + 2 * block_f * C_pad * w_item
               + bb * C_pad * 4 + 2 * bb * C_pad * o_item + _SUBLANE * C_pad * 4)
        vmem_limit = int(min(max(2 * est, 16 * 1024 * 1024), budget))

        cost = pl.CostEstimate(
            flops=2 * B * F_pad * C_pad + 5 * B * C_pad,
            transcendentals=B * C_pad,
            bytes_accessed=(B * F_pad * x_item + F_pad * C_pad * w_item
                            + C_pad * 4 + B * C_pad * o_item),
        )

        out_padded = pl.pallas_call(
            _fc_softmax_ksplit_kernel,
            out_shape=jax.ShapeDtypeStruct((B, C_pad), out_dtype),
            grid_spec=pltpu.PrefetchScalarGridSpec(
                num_scalar_prefetch=0,
                grid=(grid_b, grid_k),
                in_specs=[
                    pl.BlockSpec((block_b, block_f), lambda i, k: (i, k)),
                    pl.BlockSpec((block_f, C_pad), lambda i, k: (k, 0)),
                    pl.BlockSpec((1, C_pad), lambda i, k: (0, 0)),
                ],
                out_specs=pl.BlockSpec((block_b, C_pad), lambda i, k: (i, 0)),
                scratch_shapes=[pltpu.VMEM((block_b, C_pad), jnp.float32)],
            ),
            compiler_params=pltpu.CompilerParams(
                dimension_semantics=("parallel", "arbitrary"),
                vmem_limit_bytes=vmem_limit,
            ),
            cost_estimate=cost,
        )(x, w_p, b_p)

    if return_padded:
        return out_padded
    # NOTE: this slice is an extra XLA pass over the output; bandwidth-sensitive
    # callers should pass return_padded=True and slice/fuse in the consumer.
    return out_padded[:, :C]


def _reference(x, w, b):
    logits = x @ w + b.reshape(1, -1)
    return jax.nn.softmax(logits, axis=1)


if __name__ == "__main__":
    key = jax.random.PRNGKey(0)
    k_x, k_w, k_b, k_x2, k_w2, k_b2 = jax.random.split(key, 6)

    # ---- Case 1: demo shape (single-pass path) ----------------------------
    batch, in_feature, num_class = 8, 32, 10
    bound = 1.0 / jnp.sqrt(jnp.float32(in_feature))
    w = jax.random.uniform(k_w, (in_feature, num_class), jnp.float32, -bound, bound)
    b = jax.random.uniform(k_b, (1, num_class), jnp.float32, -bound, bound)
    x = jax.random.normal(k_x, (batch, in_feature), jnp.float32)

    out = jax.block_until_ready(fc_classifier_forward(x, w, b))
    ref = _reference(x, w, b)
    assert out.shape == (batch, num_class)
    assert jnp.allclose(out, ref, atol=2e-3, rtol=2e-3)
    assert jnp.allclose(jnp.sum(out, axis=1), jnp.ones((batch,)), atol=1e-4)

    # ---- Case 2: exercise the K-split (feature-tiled accumulator) path ----
    batch2, in2, c2 = 16, 256, 10
    bound2 = 1.0 / jnp.sqrt(jnp.float32(in2))
    w2 = jax.random.uniform(k_w2, (in2, c2), jnp.float32, -bound2, bound2)
    b2 = jax.random.uniform(k_b2, (1, c2), jnp.float32, -bound2, bound2)
    x2 = jax.random.normal(k_x2, (batch2, in2), jnp.float32)

    out2 = jax.block_until_ready(fc_classifier_forward(x2, w2, b2, block_f=128))
    ref2 = _reference(x2, w2, b2)
    assert out2.shape == (batch2, c2)
    assert jnp.allclose(out2, ref2, atol=2e-3, rtol=2e-3)
    assert jnp.allclose(jnp.sum(out2, axis=1), jnp.ones((batch2,)), atol=1e-4)

    print("KERNEL_OK")
</pallas_src>

<mosaic_0001>
module attributes {stable_mosaic.version = 11 : i64} {
  func.func @_fc_softmax_kernel(%arg0: i32, %arg1: memref<8x32xf32, #tpu.memory_space<vmem>>, %arg2: memref<32x128xf32, #tpu.memory_space<vmem>>, %arg3: memref<1x128xf32, #tpu.memory_space<vmem>>, %arg4: memref<8x128xf32, #tpu.memory_space<vmem>>) attributes {dimension_semantics = [#tpu.dimension_semantics<parallel>], iteration_bounds = array<i64: 1>, scalar_prefetch = 0 : i64, scratch_operands = 0 : i64, tpu.core_type = #tpu.core_type<tc>, window_params = [{transform_indices = @transform_0, window_bounds = array<i64: 8, 32>}, {pipeline_mode = #tpu.pipeline_mode<synchronous>, transform_indices = @transform_1, window_bounds = array<i64: 32, 128>}, {pipeline_mode = #tpu.pipeline_mode<synchronous>, transform_indices = @transform_2, window_bounds = array<i64: 1, 128>}, {transform_indices = @transform_3, window_bounds = array<i64: 8, 128>}]} {
    %c0 = arith.constant 0 : index
    %c0_0 = arith.constant 0 : index
    %0 = vector.load %arg1[%c0, %c0_0] : memref<8x32xf32, #tpu.memory_space<vmem>>, vector<8x32xf32>
    %c0_1 = arith.constant 0 : index
    %c0_2 = arith.constant 0 : index
    %1 = vector.load %arg2[%c0_1, %c0_2] : memref<32x128xf32, #tpu.memory_space<vmem>>, vector<32x128xf32>
    %cst = arith.constant dense<0.000000e+00> : vector<8x128xf32>
    %2 = tpu.matmul %0, %1, %cst {dimension_numbers = #tpu.dot_dimension_numbers<[1], [0], [0], [1], [0, 0, 1, 1], [], []>} : vector<8x32xf32>, vector<32x128xf32>, vector<8x128xf32> -> vector<8x128xf32>
    %c0_3 = arith.constant 0 : index
    %c0_4 = arith.constant 0 : index
    %3 = vector.load %arg3[%c0_3, %c0_4] : memref<1x128xf32, #tpu.memory_space<vmem>>, vector<1x128xf32>
    %4 = vector.broadcast %3 : vector<1x128xf32> to vector<8x128xf32>
    %5 = arith.addf %2, %4 : vector<8x128xf32>
    %cst_5 = arith.constant dense<0xFF800000> : vector<8xf32>
    %6 = vector.multi_reduction <maximumf>, %5, %cst_5 [1] : vector<8x128xf32> to vector<8xf32>
    %7 = vector.shape_cast %6 : vector<8xf32> to vector<8x1xf32>
    %8 = vector.broadcast %7 : vector<8x1xf32> to vector<8x128xf32>
    %9 = arith.subf %5, %8 : vector<8x128xf32>
    %10 = math.exp %9 : vector<8x128xf32>
    %cst_6 = arith.constant dense<0.000000e+00> : vector<8xf32>
    %11 = vector.multi_reduction <add>, %10, %cst_6 [1] : vector<8x128xf32> to vector<8xf32>
    %12 = vector.shape_cast %11 : vector<8xf32> to vector<8x1xf32>
    %13 = vector.broadcast %12 : vector<8x1xf32> to vector<8x128xf32>
    %14 = arith.divf %10, %13 : vector<8x128xf32>
    %c0_7 = arith.constant 0 : index
    %c0_8 = arith.constant 0 : index
    %15 = vector.load %arg4[%c0_7, %c0_8] : memref<8x128xf32, #tpu.memory_space<vmem>>, vector<8x128xf32>
    tpu.vector_store %arg4[%c0_7, %c0_8], %14 {strides = array<i32>} : memref<8x128xf32, #tpu.memory_space<vmem>>, vector<8x128xf32>,
    return
  }
  func.func @transform_0(%arg0: i32) -> (i32, i32) {
    %c0_i32 = arith.constant 0 : i32
    %c0_i32_0 = arith.constant 0 : i32
    return %arg0, %c0_i32 : i32, i32
  }
  func.func @transform_1(%arg0: i32) -> (i32, i32) {
    %c0_i32 = arith.constant 0 : i32
    %c0_i32_0 = arith.constant 0 : i32
    %c0_i32_1 = arith.constant 0 : i32
    return %c0_i32, %c0_i32_0 : i32, i32
  }
  func.func @transform_2(%arg0: i32) -> (i32, i32) {
    %c0_i32 = arith.constant 0 : i32
    %c0_i32_0 = arith.constant 0 : i32
    %c0_i32_1 = arith.constant 0 : i32
    return %c0_i32, %c0_i32_0 : i32, i32
  }
  func.func @transform_3(%arg0: i32) -> (i32, i32) {
    %c0_i32 = arith.constant 0 : i32
    %c0_i32_0 = arith.constant 0 : i32
    return %arg0, %c0_i32 : i32, i32
  }
}

</mosaic_0001>

<llo_original>
// kernel: tpu_custom_call.1
$region0: #{tpu_custom_call.1}
  #allocation0 [shape = 'u32[]', space=smem, size = 0x4, offset = 0x4, fixed_abs, tag = 'smem constant byte address 0x4 - core index']
  #allocation1 [shape = 'u32[144,128]{1,0:T(1,128)}', space=vmem, size = 0x12000, scoped, tag = 'internal scratch']
  %s0 = inlined_call_operand.hbm [shape: f32[8,32], index: 0, kind: input, shape index: {}]
  %s1 = inlined_call_operand.hbm [shape: f32[32,128], index: 1, kind: input, shape index: {}]
  %s2 = inlined_call_operand.vmem [shape: f32[1,128], index: 2, kind: input, shape index: {}]
  %s3 = inlined_call_operand.hbm [shape: f32[8,128], index: 3, kind: output, shape index: {}]
  %s4 = sld [smem:[#allocation0]]
  $region30: #{tpu_custom_call.1} parent=0
    _
  %s6 = ssub.s32 1, %s4
  %s7 = scalar_select 0, %s6, %s4
  $region1: #{tpu_custom_call.1} parent=0
    #allocation2 [shape = 'u8[4096]{0}', space=vmem, size = 0x1000, scoped, tag = 'input window, operand 0, single buffered']
    #allocation3 [shape = 's32[1]{0}', space=sflag, size = 0x4, scoped, tag = 'scoped memory for tpu_custom_call.1']
    #allocation4 [shape = 's32[1]{0}', space=sflag, size = 0x4, scoped, tag = 'scoped memory for tpu_custom_call.1']
    #allocation5 [shape = 'u8[16384]{0}', space=vmem, size = 0x4000, scoped, tag = 'input window, operand 1, single buffered']
    #allocation6 [shape = 's32[1]{0}', space=sflag, size = 0x4, scoped, tag = 'scoped memory for tpu_custom_call.1']
    #allocation7 [shape = 'u8[4096]{0}', space=vmem, size = 0x1000, scoped, tag = 'output window, operand 0, single buffered']
    %8 = vsyncpa [#allocation3], 0
    %9 = vsyncpa [#allocation6], 0
    %10 = vsyncpa [#allocation4], 0
    // Predicated region
    $region2: #{tpu_custom_call.1} parent=1 // pred_check
      _
    $region3: #{tpu_custom_call.1} parent=1 // pred_check_branch
      %12 = sbr.rel (0) target = $region5
    $region4: #{tpu_custom_call.1} parent=1 // pred_region
      %s14 = ssub.s32 128, 128
      %15 = vsyncadd [#allocation3], %s14
      %s17 = sshll.u32 [#allocation2], 4
      %s18 = int_to_ptr.vmem [resolvable:$true] %s17
      %20 = dma.hbm_to_vmem [thread:$0]  %s0, 128, %s18, [#allocation3]
    $region5: #{tpu_custom_call.1} parent=1 // pred_fallthru
      _
    // Predicated region
    $region6: #{tpu_custom_call.1} parent=1 // pred_check
      _
    $region7: #{tpu_custom_call.1} parent=1 // pred_check_branch
      %22 = sbr.rel (0) target = $region9
    $region8: #{tpu_custom_call.1} parent=1 // pred_region
      %s24 = ssub.s32 512, 512
      %25 = vsyncadd [#allocation6], %s24
      %s26 = sshll.u32 [#allocation5], 4
      %s27 = int_to_ptr.vmem [resolvable:$true] %s26
      %32 = dma.hbm_to_vmem [thread:$0]  %s1, 512, %s27, [#allocation6], 128, 128, 8
    $region9: #{tpu_custom_call.1} parent=1 // pred_fallthru
      _
    // Predicated region
    $region10: #{tpu_custom_call.1} parent=1 // pred_check
      _
    $region11: #{tpu_custom_call.1} parent=1 // pred_check_branch
      %34 = sbr.rel (0) target = $region13
    $region12: #{tpu_custom_call.1} parent=1 // pred_region
      _
    $region13: #{tpu_custom_call.1} parent=1 // pred_fallthru
      _
    // Predicated region
    $region14: #{tpu_custom_call.1} parent=1 // pred_check
      _
    $region15: #{tpu_custom_call.1} parent=1 // pred_check_branch
      %36 = sbr.rel (0) target = $region17
    $region16: #{tpu_custom_call.1} parent=1 // pred_region
      %37 = dma.done [#allocation3], 128
    $region17: #{tpu_custom_call.1} parent=1 // pred_fallthru
      _
    // Predicated region
    $region18: #{tpu_custom_call.1} parent=1 // pred_check
      _
    $region19: #{tpu_custom_call.1} parent=1 // pred_check_branch
      %39 = sbr.rel (0) target = $region21
    $region20: #{tpu_custom_call.1} parent=1 // pred_region
      %40 = dma.done [#allocation6], 512
    $region21: #{tpu_custom_call.1} parent=1 // pred_fallthru
      _
    %v41 = vld [vmem:[#allocation2] sm:$0xff]
    %v42 = vld [vmem:[#allocation5] sm:$0xff]
    %v43 = vld [vmem:[#allocation5 + $0x8] sm:$0xff]
    %v44 = vld [vmem:[#allocation5 + $0x10] sm:$0xff]
    %v45 = vld [vmem:[#allocation5 + $0x18] sm:$0xff]
    %v46 = vld [vmem:[%s2] sm:$0x1]
    %v48 = vlaneseq
    %v49 = vshrl.u32 %v48, 7
    %v50 = vsub.s32 0, %v49
    %v51 = vrot.slane %v46, %v50
    %vm53 = vcmask 261120
    %v55 = vsel %vm53, %v41, 0
    %57 = vmatprep.subr.mxu0 0.0
    %58 = vmatpush1.msra.mxu0 0.0
    %59 = vmatprep.subr.mxu0 0.0
    %60 = vmatpush1.msra.mxu0 0.0
    %61 = vmatprep.subr.mxu0 0.0
    %62 = vmatpush1.msra.mxu0 0.0
    %63 = vmatprep.subr.mxu0 0.0
    %64 = vmatpush1.msra.mxu0 0.0
    %65 = vmatprep.subr.mxu0 0.0
    %66 = vmatpush1.msra.mxu0 0.0
    %67 = vmatprep.subr.mxu0 0.0
    %68 = vmatpush1.msra.mxu0 0.0
    %69 = vmatprep.subr.mxu0 0.0
    %70 = vmatpush1.msra.mxu0 0.0
    %71 = vmatprep.subr.mxu0 0.0
    %72 = vmatpush1.msra.mxu0 0.0
    %73 = vmatprep.subr.mxu0 0.0
    %74 = vmatpush1.msra.mxu0 0.0
    %75 = vmatprep.subr.mxu0 0.0
    %76 = vmatpush1.msra.mxu0 0.0
    %77 = vmatprep.subr.mxu0 0.0
    %78 = vmatpush1.msra.mxu0 0.0
    %79 = vmatprep.subr.mxu0 0.0
    %80 = vmatpush1.msra.mxu0 0.0
    %81 = vmatprep.subr.mxu0 0.0
    %82 = vmatpush1.msra.mxu0 %v45
    %83 = vmatprep.subr.mxu0 0.0
    %84 = vmatpush1.msra.mxu0 %v44
    %85 = vmatprep.subr.mxu0 0.0
    %86 = vmatpush1.msra.mxu0 %v43
    %87 = vmatprep.subr.mxu0 0.0
    %88 = vmatpush1.msra.mxu0 %v42
    %89 = vmatprep.subr.mxu0 0.0
    %90 = vmatpush2.msra.mxu0 0.0
    %91 = vmatprep.subr.mxu0 0.0
    %92 = vmatpush2.msra.mxu0 0.0
    %93 = vmatprep.subr.mxu0 0.0
    %94 = vmatpush2.msra.mxu0 0.0
    %95 = vmatprep.subr.mxu0 0.0
    %96 = vmatpush2.msra.mxu0 0.0
    %97 = vmatprep.subr.mxu0 0.0
    %98 = vmatpush2.msra.mxu0 0.0
    %99 = vmatprep.subr.mxu0 0.0
    %100 = vmatpush2.msra.mxu0 0.0
    %101 = vmatprep.subr.mxu0 0.0
    %102 = vmatpush2.msra.mxu0 0.0
    %103 = vmatprep.subr.mxu0 0.0
    %104 = vmatpush2.msra.mxu0 0.0
    %105 = vmatprep.subr.mxu0 0.0
    %106 = vmatpush2.msra.mxu0 0.0
    %107 = vmatprep.subr.mxu0 0.0
    %108 = vmatpush2.msra.mxu0 0.0
    %109 = vmatprep.subr.mxu0 0.0
    %110 = vmatpush2.msra.mxu0 0.0
    %111 = vmatprep.subr.mxu0 0.0
    %112 = vmatpush2.msra.mxu0 0.0
    %113 = vmatprep.subr.mxu0 0.0
    %114 = vmatpush2.msra.mxu0 0.0
    %115 = vmatprep.subr.mxu0 0.0
    %116 = vmatpush2.msra.mxu0 0.0
    %117 = vmatprep.subr.mxu0 0.0
    %118 = vmatpush2.msra.mxu0 0.0
    %119 = vmatprep.subr.mxu0 0.0
    %120 = vmatpush2.msra.mxu0 0.0
    %121 = vmatprep.mubr.f32.mxu0 0.0
    %122 = vmatmul.mubr.f32.gmra.mxu0 %v55
    %v123 = vpop.f32.mrf.mxu0
    %v124 = vadd.f32 %v51, %v123
    %v125 = vpop.f32.mrf.mxu0
    %126 = vdwg.mxu0
    %127 = vmax.xlane.f32.xlu0 %v124
    %v128 = vpop.xlane.xlu0 %127
    %v129 = vsub.f32 %v124, %v128
    %v130 = vmul.f32 %v129, 1.442695
    %v131 = vpow.pop %v130
    %132 = vadd.xlane.f32.xlu0 %v131
    %v133 = vpop.xlane.xlu0 %132
    %v134 = vrcp.pop %v133
    %v135 = vmul.f32 %v131, %v134
    %136 = vst [vmem:[#allocation7] sm:$0xff] %v135
    // Predicated region
    $region22: #{tpu_custom_call.1} parent=1 // pred_check
      _
    $region23: #{tpu_custom_call.1} parent=1 // pred_check_branch
      %138 = sbr.rel (0) target = $region25
    $region24: #{tpu_custom_call.1} parent=1 // pred_region
      %s140 = ssub.s32 128, 128
      %141 = vsyncadd [#allocation4], %s140
      %s143 = sshll.u32 [#allocation7], 4
      %s144 = int_to_ptr.vmem [resolvable:$true] %s143
      %146 = dma.vmem_to_hbm [thread:$0]  %s144, 128, %s3, [#allocation4]
    $region25: #{tpu_custom_call.1} parent=1 // pred_fallthru
      _
    // Predicated region
    $region26: #{tpu_custom_call.1} parent=1 // pred_check
      _
    $region27: #{tpu_custom_call.1} parent=1 // pred_check_branch
      %148 = sbr.rel (0) target = $region29
    $region28: #{tpu_custom_call.1} parent=1 // pred_region
      %149 = dma.done [#allocation4], 128
    $region29: #{tpu_custom_call.1} parent=1 // pred_fallthru
      _
    %150 = vsyncpa [#allocation3], 1
    %151 = vsyncpa [#allocation6], 1
    %152 = vsyncpa [#allocation4], 1

</llo_original>
